<compile_context>
chip_gen: v6e
topology: v6e:2x2x1
jax: 0.10.0
libtpu: 0.0.40
codegen_flags: <defaults>
</compile_context>

<pallas_src>
import jax
import jax.numpy as jnp
from jax.experimental import pallas as pl
from jax.experimental.pallas import tpu as pltpu

_LANE = 128  # vreg lane width: output / contraction tiles kept multiples of this


def _round_up(x, m):
    return ((x + m - 1) // m) * m


def _cdiv(a, b):
    return (a + b - 1) // b


def _default_vmem_budget():
    """Generation-aware VMEM budget: ~75% of physical, capped at 64 MiB.
    v5e/v6e (128 MiB) -> 64 MiB, v7x (64 MiB) -> 48 MiB, unknown -> 48 MiB."""
    cap = None
    try:
        cap = getattr(pltpu.get_tpu_info(), "vmem_capacity_bytes", None)
    except Exception:
        cap = None
    if not cap:
        cap = 64 << 20
    return int(min((int(cap) * 3) // 4, 64 << 20))


def _row_align(*dtypes):
    """Sublane alignment for the second-to-last block dim (f32:8, bf16:16, 8b:32)."""
    a = 8
    for dt in dtypes:
        a = max(a, 32 // max(1, jnp.dtype(dt).itemsize))
    return a


def _single_buffered_spec(block_shape, index_map):
    """Resident block (constant index_map): request single buffering to save
    VMEM; fall back to a plain (double-buffered) BlockSpec if unsupported."""
    try:
        return pl.BlockSpec(block_shape, index_map, pipeline_mode=pl.Buffered(1))
    except Exception:
        return pl.BlockSpec(block_shape, index_map)


def _softmax_rows(logits_f32):
    # Numerically stable row softmax, all in f32, exact divide (PyTorch parity).
    m = jnp.max(logits_f32, axis=-1, keepdims=True)
    e = jnp.exp(logits_f32 - m)
    return e / jnp.sum(e, axis=-1, keepdims=True)


# ----------------------------- kernels --------------------------------------

def _resident_kernel(x_ref, w_ref, b_ref, o_ref):
    # One (TM, D_pad) output tile per grid step; W / bias are VMEM-resident.
    x = x_ref[...].astype(w_ref.dtype)               # in-kernel cast (VPU, free)
    logits = jnp.dot(x, w_ref[...], preferred_element_type=jnp.float32) + b_ref[...]
    o_ref[...] = _softmax_rows(logits).astype(o_ref.dtype)


def _ktiled_kernel(x_ref, w_ref, b_ref, o_ref, acc_ref):
    # grid = (M tiles, K tiles); f32 accumulator, softmax at the final K step.
    k = pl.program_id(1)

    @pl.when(k == 0)
    def _():
        acc_ref[...] = jnp.zeros_like(acc_ref)

    x = x_ref[...].astype(w_ref.dtype)
    acc_ref[...] += jnp.dot(x, w_ref[...], preferred_element_type=jnp.float32)

    @pl.when(k == pl.num_programs(1) - 1)
    def _():
        logits = acc_ref[...] + b_ref[...]           # bias add stays f32
        o_ref[...] = _softmax_rows(logits).astype(o_ref.dtype)


# ----------------------------- wrappers --------------------------------------

def prepare_linear_softmax_params(w, b, *, compute_dtype=jnp.float32,
                                  vmem_budget_bytes=None):
    """One-time weight preparation (call once, outside the hot path).

    w: (D_in, D_out)  (i.e. torch fc.weight.T),  b: (D_out,).
    Pads D_out up to a lane-dense multiple of 128 when needed (zero weight
    columns + -1e30 bias so padded logits contribute exp() == 0), casts W to
    `compute_dtype` (e.g. bf16 on v6e/v7x), and decides resident-W vs K-tiled.
    """
    d_in, d_out = w.shape
    budget = int(vmem_budget_bytes) if vmem_budget_bytes else _default_vmem_budget()

    d_pad = d_out if d_out % _LANE == 0 else _round_up(max(d_out, _LANE), _LANE)
    if d_pad != d_out:
        w = jnp.pad(w, ((0, 0), (0, d_pad - d_out)))
        b = jnp.pad(b, (0, d_pad - d_out), constant_values=-1e30)

    w_isz = jnp.dtype(compute_dtype).itemsize
    resident_bytes = d_in * d_pad * w_isz + d_pad * 4     # single-buffered W + bias
    min_stream = 2 * 8 * (d_in * 4 + d_pad * 4)           # minimal x/out tile pair
    use_ktiled = resident_bytes + min_stream > budget

    k_in = d_in
    if use_ktiled:
        # K-tiled fallback: pad the contraction dim once so every K tile is
        # exact (zero weight rows => padded x columns contribute nothing).
        k_in = _round_up(d_in, _LANE)
        if k_in != d_in:
            w = jnp.pad(w, ((0, k_in - d_in), (0, 0)))

    return dict(
        w=w.astype(compute_dtype),
        b=b.reshape(1, d_pad).astype(jnp.float32),         # bias / softmax stay f32
        d_in=d_in, d_out=d_out, d_pad=d_pad, k_in=k_in,
        use_ktiled=use_ktiled, budget=budget,
    )


def linear_softmax_prepared(x, params, *, tm=512, out_dtype=jnp.float32):
    """softmax(x @ W + b, axis=1) using pre-prepared params."""
    B, d_in_x = x.shape
    w, b = params["w"], params["b"]
    d_in, d_out, d_pad = params["d_in"], params["d_out"], params["d_pad"]
    k_in, budget = params["k_in"], params["budget"]
    assert d_in_x == d_in, "input feature dim mismatch"

    x_isz = jnp.dtype(x.dtype).itemsize
    w_isz = jnp.dtype(w.dtype).itemsize
    o_isz = jnp.dtype(out_dtype).itemsize
    align = _row_align(x.dtype, out_dtype)         # 8 for f32, 16 for bf16 tiles
    vmem_limit = _default_vmem_budget()

    if not params["use_ktiled"]:
        # ------- resident-W path: grid over batch tiles only ------------------
        fixed = d_in * d_pad * w_isz + d_pad * 4             # W + bias (1x)
        per_row = 2 * (d_in * x_isz + d_pad * o_isz)          # 2x-buffered x / out
        TM = min(_round_up(tm, align), _round_up(B, align))
        while TM > align and fixed + TM * per_row > budget:
            TM //= 2
        TM = max(align, (TM // align) * align)
        if B > align:   # >=2 grid steps so megacore (v7x) shards the batch axis
            TM = min(TM, _round_up(_cdiv(B, 2), align))
        grid = (_cdiv(B, TM),)

        cost = pl.CostEstimate(
            flops=2 * B * d_in * d_pad,
            transcendentals=B * d_pad,
            bytes_accessed=(B * d_in * x_isz + d_in * d_pad * w_isz
                            + d_pad * 4 + B * d_pad * o_isz),
        )
        out = pl.pallas_call(
            _resident_kernel,
            out_shape=jax.ShapeDtypeStruct((B, d_pad), out_dtype),
            grid_spec=pltpu.PrefetchScalarGridSpec(
                num_scalar_prefetch=0,
                grid=grid,
                in_specs=[
                    pl.BlockSpec((TM, d_in), lambda i: (i, 0)),         # streamed x
                    _single_buffered_spec((d_in, d_pad), lambda i: (0, 0)),  # resident W
                    _single_buffered_spec((1, d_pad), lambda i: (0, 0)),     # resident b
                ],
                out_specs=pl.BlockSpec((TM, d_pad), lambda i: (i, 0)),
            ),
            compiler_params=pltpu.CompilerParams(
                dimension_semantics=("parallel",),
                vmem_limit_bytes=vmem_limit,
            ),
            cost_estimate=cost,
        )(x, w, b)
    else:
        # ------- K-tiled fallback: W too large to keep resident ---------------
        if k_in != d_in:
            # TODO(synk): avoid this per-call x pad by masking the final K tile.
            x = jnp.pad(x, ((0, 0), (0, k_in - d_in)))
        # TK: largest multiple of 128 dividing k_in whose double-buffered W slab
        # fits half the budget (fallback 128 always divides the padded k_in).
        m = k_in // _LANE
        TK = _LANE
        for d in range(m, 0, -1):
            if m % d == 0 and 2 * (d * _LANE) * d_pad * w_isz <= budget // 2:
                TK = d * _LANE
                break
        rem = budget - 2 * TK * d_pad * w_isz - d_pad * 4
        per_row = d_pad * 4 + 2 * (TK * x_isz + d_pad * o_isz)   # acc + x/out tiles
        TM = min(_round_up(tm, align), _round_up(B, align))
        while TM > align and TM * per_row > rem:
            TM //= 2
        TM = max(align, (TM // align) * align)
        if B > align:
            TM = min(TM, _round_up(_cdiv(B, 2), align))
        grid = (_cdiv(B, TM), k_in // TK)

        cost = pl.CostEstimate(
            flops=2 * B * k_in * d_pad,
            transcendentals=B * d_pad,
            bytes_accessed=(B * k_in * x_isz + k_in * d_pad * w_isz
                            + d_pad * 4 + B * d_pad * o_isz),
        )
        out = pl.pallas_call(
            _ktiled_kernel,
            out_shape=jax.ShapeDtypeStruct((B, d_pad), out_dtype),
            grid_spec=pltpu.PrefetchScalarGridSpec(
                num_scalar_prefetch=0,
                grid=grid,
                in_specs=[
                    pl.BlockSpec((TM, TK), lambda i, k: (i, k)),
                    pl.BlockSpec((TK, d_pad), lambda i, k: (k, 0)),
                    _single_buffered_spec((1, d_pad), lambda i, k: (0, 0)),
                ],
                out_specs=pl.BlockSpec((TM, d_pad), lambda i, k: (i, 0)),
                scratch_shapes=[pltpu.VMEM((TM, d_pad), jnp.float32)],
            ),
            compiler_params=pltpu.CompilerParams(
                dimension_semantics=("parallel", "arbitrary"),
                vmem_limit_bytes=vmem_limit,
            ),
            cost_estimate=cost,
        )(x, w, b)

    # Column slice only when D_out was padded (skipped when D_out % 128 == 0).
    return out if d_pad == d_out else out[:, :d_out]


def linear_softmax(x, w, b, *, tm=512, compute_dtype=jnp.float32,
                   out_dtype=jnp.float32, vmem_budget_bytes=None):
    """Convenience one-shot wrapper (prefer prepare_* + *_prepared in hot loops)."""
    params = prepare_linear_softmax_params(
        w, b, compute_dtype=compute_dtype, vmem_budget_bytes=vmem_budget_bytes)
    return linear_softmax_prepared(x, params, tm=tm, out_dtype=out_dtype)


if __name__ == "__main__":
    key = jax.random.PRNGKey(0)

    # ---- 1) Small shapes consistent with LINEAR_SOFTMAX(input_dim=32, output_dim=16)
    batch, input_dim, output_dim = 8, 32, 16
    kx, kw, kb = jax.random.split(key, 3)
    x = jax.random.normal(kx, (batch, input_dim), dtype=jnp.float32)
    bound = 1.0 / (input_dim ** 0.5)                 # nn.Linear default init range
    w_torch = jax.random.uniform(kw, (output_dim, input_dim),
                                 minval=-bound, maxval=bound, dtype=jnp.float32)
    b = jax.random.uniform(kb, (output_dim,),
                           minval=-bound, maxval=bound, dtype=jnp.float32)
    w = w_torch.T                                    # kernel consumes (D_in, D_out)

    params = prepare_linear_softmax_params(w, b)     # one-time weight prep
    out = linear_softmax_prepared(x, params)
    jax.block_until_ready(out)
    ref = jax.nn.softmax(x @ w + b, axis=1)
    assert out.shape == (batch, output_dim)
    assert jnp.allclose(out, ref, atol=1e-4, rtol=1e-4)
    assert jnp.allclose(jnp.sum(out, axis=1), 1.0, atol=1e-4)

    # bf16 weight path (f32 accumulation / softmax), looser tolerance.
    out_bf16w = linear_softmax(x, w, b, compute_dtype=jnp.bfloat16)
    jax.block_until_ready(out_bf16w)
    assert jnp.allclose(out_bf16w, ref, atol=1e-2, rtol=1e-2)

    # ---- 2) Ragged batch + D_out % 128 == 0 fast path (no pad, no slice) -----
    b2_, in2, o2 = 300, 256, 256
    k2x, k2w, k2b = jax.random.split(jax.random.PRNGKey(1), 3)
    x2 = jax.random.normal(k2x, (b2_, in2), dtype=jnp.float32)
    w2 = jax.random.normal(k2w, (in2, o2), dtype=jnp.float32) * 0.05
    bb2 = jax.random.normal(k2b, (o2,), dtype=jnp.float32) * 0.05
    out2 = linear_softmax(x2, w2, bb2)
    jax.block_until_ready(out2)
    ref2 = jax.nn.softmax(x2 @ w2 + bb2, axis=1)
    assert out2.shape == (b2_, o2)
    assert jnp.allclose(out2, ref2, atol=2e-4, rtol=2e-4)

    # ---- 3) Forced K-tiled fallback (tiny budget) + padded D_in / D_out ------
    b3_, in3, o3 = 70, 2000, 1000
    k3x, k3w, k3b = jax.random.split(jax.random.PRNGKey(2), 3)
    x3 = jax.random.normal(k3x, (b3_, in3), dtype=jnp.float32)
    w3 = jax.random.normal(k3w, (in3, o3), dtype=jnp.float32) * 0.02
    bb3 = jax.random.normal(k3b, (o3,), dtype=jnp.float32) * 0.02
    out3 = linear_softmax(x3, w3, bb3, vmem_budget_bytes=4 << 20)
    jax.block_until_ready(out3)
    ref3 = jax.nn.softmax(x3 @ w3 + bb3, axis=1)
    assert out3.shape == (b3_, o3)
    assert jnp.allclose(out3, ref3, atol=2e-4, rtol=2e-4)

    print("KERNEL_OK")
</pallas_src>

<mosaic_0001>
module attributes {stable_mosaic.version = 11 : i64} {
  func.func @_resident_kernel(%arg0: i32, %arg1: memref<8x32xf32, #tpu.memory_space<vmem>>, %arg2: memref<32x128xf32, #tpu.memory_space<vmem>>, %arg3: memref<1x128xf32, #tpu.memory_space<vmem>>, %arg4: memref<8x128xf32, #tpu.memory_space<vmem>>) attributes {dimension_semantics = [#tpu.dimension_semantics<parallel>], iteration_bounds = array<i64: 1>, scalar_prefetch = 0 : i64, scratch_operands = 0 : i64, tpu.core_type = #tpu.core_type<tc>, window_params = [{transform_indices = @transform_0, window_bounds = array<i64: 8, 32>}, {pipeline_mode = #tpu.pipeline_mode<synchronous>, transform_indices = @transform_1, window_bounds = array<i64: 32, 128>}, {pipeline_mode = #tpu.pipeline_mode<synchronous>, transform_indices = @transform_2, window_bounds = array<i64: 1, 128>}, {transform_indices = @transform_3, window_bounds = array<i64: 8, 128>}]} {
    %c0 = arith.constant 0 : index
    %c0_0 = arith.constant 0 : index
    %0 = vector.load %arg1[%c0, %c0_0] : memref<8x32xf32, #tpu.memory_space<vmem>>, vector<8x32xf32>
    %c0_1 = arith.constant 0 : index
    %c0_2 = arith.constant 0 : index
    %1 = vector.load %arg2[%c0_1, %c0_2] : memref<32x128xf32, #tpu.memory_space<vmem>>, vector<32x128xf32>
    %cst = arith.constant dense<0.000000e+00> : vector<8x128xf32>
    %2 = tpu.matmul %0, %1, %cst {dimension_numbers = #tpu.dot_dimension_numbers<[1], [0], [0], [1], [0, 0, 1, 1], [], []>} : vector<8x32xf32>, vector<32x128xf32>, vector<8x128xf32> -> vector<8x128xf32>
    %c0_3 = arith.constant 0 : index
    %c0_4 = arith.constant 0 : index
    %3 = vector.load %arg3[%c0_3, %c0_4] : memref<1x128xf32, #tpu.memory_space<vmem>>, vector<1x128xf32>
    %4 = vector.broadcast %3 : vector<1x128xf32> to vector<8x128xf32>
    %5 = arith.addf %2, %4 : vector<8x128xf32>
    %cst_5 = arith.constant dense<0xFF800000> : vector<8xf32>
    %6 = vector.multi_reduction <maximumf>, %5, %cst_5 [1] : vector<8x128xf32> to vector<8xf32>
    %7 = vector.shape_cast %6 : vector<8xf32> to vector<8x1xf32>
    %8 = vector.broadcast %7 : vector<8x1xf32> to vector<8x128xf32>
    %9 = arith.subf %5, %8 : vector<8x128xf32>
    %10 = math.exp %9 : vector<8x128xf32>
    %cst_6 = arith.constant dense<0.000000e+00> : vector<8xf32>
    %11 = vector.multi_reduction <add>, %10, %cst_6 [1] : vector<8x128xf32> to vector<8xf32>
    %12 = vector.shape_cast %11 : vector<8xf32> to vector<8x1xf32>
    %13 = vector.broadcast %12 : vector<8x1xf32> to vector<8x128xf32>
    %14 = arith.divf %10, %13 : vector<8x128xf32>
    %c0_7 = arith.constant 0 : index
    %c0_8 = arith.constant 0 : index
    %15 = vector.load %arg4[%c0_7, %c0_8] : memref<8x128xf32, #tpu.memory_space<vmem>>, vector<8x128xf32>
    tpu.vector_store %arg4[%c0_7, %c0_8], %14 {strides = array<i32>} : memref<8x128xf32, #tpu.memory_space<vmem>>, vector<8x128xf32>,
    return
  }
  func.func @transform_0(%arg0: i32) -> (i32, i32) {
    %c0_i32 = arith.constant 0 : i32
    %c0_i32_0 = arith.constant 0 : i32
    return %arg0, %c0_i32 : i32, i32
  }
  func.func @transform_1(%arg0: i32) -> (i32, i32) {
    %c0_i32 = arith.constant 0 : i32
    %c0_i32_0 = arith.constant 0 : i32
    %c0_i32_1 = arith.constant 0 : i32
    return %c0_i32, %c0_i32_0 : i32, i32
  }
  func.func @transform_2(%arg0: i32) -> (i32, i32) {
    %c0_i32 = arith.constant 0 : i32
    %c0_i32_0 = arith.constant 0 : i32
    %c0_i32_1 = arith.constant 0 : i32
    return %c0_i32, %c0_i32_0 : i32, i32
  }
  func.func @transform_3(%arg0: i32) -> (i32, i32) {
    %c0_i32 = arith.constant 0 : i32
    %c0_i32_0 = arith.constant 0 : i32
    return %arg0, %c0_i32 : i32, i32
  }
}

</mosaic_0001>

<llo_original>
// kernel: tpu_custom_call.1
$region0: #{tpu_custom_call.1}
  #allocation0 [shape = 'u32[]', space=smem, size = 0x4, offset = 0x4, fixed_abs, tag = 'smem constant byte address 0x4 - core index']
  #allocation1 [shape = 'u32[144,128]{1,0:T(1,128)}', space=vmem, size = 0x12000, scoped, tag = 'internal scratch']
  %s0 = inlined_call_operand.hbm [shape: f32[8,32], index: 0, kind: input, shape index: {}]
  %s1 = inlined_call_operand.hbm [shape: f32[32,128], index: 1, kind: input, shape index: {}]
  %s2 = inlined_call_operand.vmem [shape: f32[1,128], index: 2, kind: input, shape index: {}]
  %s3 = inlined_call_operand.hbm [shape: f32[8,128], index: 3, kind: output, shape index: {}]
  %s4 = sld [smem:[#allocation0]]
  $region30: #{tpu_custom_call.1} parent=0
    _
  %s6 = ssub.s32 1, %s4
  %s7 = scalar_select 0, %s6, %s4
  $region1: #{tpu_custom_call.1} parent=0
    #allocation2 [shape = 'u8[4096]{0}', space=vmem, size = 0x1000, scoped, tag = 'input window, operand 0, single buffered']
    #allocation3 [shape = 's32[1]{0}', space=sflag, size = 0x4, scoped, tag = 'scoped memory for tpu_custom_call.1']
    #allocation4 [shape = 's32[1]{0}', space=sflag, size = 0x4, scoped, tag = 'scoped memory for tpu_custom_call.1']
    #allocation5 [shape = 'u8[16384]{0}', space=vmem, size = 0x4000, scoped, tag = 'input window, operand 1, single buffered']
    #allocation6 [shape = 's32[1]{0}', space=sflag, size = 0x4, scoped, tag = 'scoped memory for tpu_custom_call.1']
    #allocation7 [shape = 'u8[4096]{0}', space=vmem, size = 0x1000, scoped, tag = 'output window, operand 0, single buffered']
    %8 = vsyncpa [#allocation3], 0
    %9 = vsyncpa [#allocation6], 0
    %10 = vsyncpa [#allocation4], 0
    // Predicated region
    $region2: #{tpu_custom_call.1} parent=1 // pred_check
      _
    $region3: #{tpu_custom_call.1} parent=1 // pred_check_branch
      %12 = sbr.rel (0) target = $region5
    $region4: #{tpu_custom_call.1} parent=1 // pred_region
      %s14 = ssub.s32 128, 128
      %15 = vsyncadd [#allocation3], %s14
      %s17 = sshll.u32 [#allocation2], 4
      %s18 = int_to_ptr.vmem [resolvable:$true] %s17
      %20 = dma.hbm_to_vmem [thread:$0]  %s0, 128, %s18, [#allocation3]
    $region5: #{tpu_custom_call.1} parent=1 // pred_fallthru
      _
    // Predicated region
    $region6: #{tpu_custom_call.1} parent=1 // pred_check
      _
    $region7: #{tpu_custom_call.1} parent=1 // pred_check_branch
      %22 = sbr.rel (0) target = $region9
    $region8: #{tpu_custom_call.1} parent=1 // pred_region
      %s24 = ssub.s32 512, 512
      %25 = vsyncadd [#allocation6], %s24
      %s26 = sshll.u32 [#allocation5], 4
      %s27 = int_to_ptr.vmem [resolvable:$true] %s26
      %32 = dma.hbm_to_vmem [thread:$0]  %s1, 512, %s27, [#allocation6], 128, 128, 8
    $region9: #{tpu_custom_call.1} parent=1 // pred_fallthru
      _
    // Predicated region
    $region10: #{tpu_custom_call.1} parent=1 // pred_check
      _
    $region11: #{tpu_custom_call.1} parent=1 // pred_check_branch
      %34 = sbr.rel (0) target = $region13
    $region12: #{tpu_custom_call.1} parent=1 // pred_region
      _
    $region13: #{tpu_custom_call.1} parent=1 // pred_fallthru
      _
    // Predicated region
    $region14: #{tpu_custom_call.1} parent=1 // pred_check
      _
    $region15: #{tpu_custom_call.1} parent=1 // pred_check_branch
      %36 = sbr.rel (0) target = $region17
    $region16: #{tpu_custom_call.1} parent=1 // pred_region
      %37 = dma.done [#allocation3], 128
    $region17: #{tpu_custom_call.1} parent=1 // pred_fallthru
      _
    // Predicated region
    $region18: #{tpu_custom_call.1} parent=1 // pred_check
      _
    $region19: #{tpu_custom_call.1} parent=1 // pred_check_branch
      %39 = sbr.rel (0) target = $region21
    $region20: #{tpu_custom_call.1} parent=1 // pred_region
      %40 = dma.done [#allocation6], 512
    $region21: #{tpu_custom_call.1} parent=1 // pred_fallthru
      _
    %v41 = vld [vmem:[#allocation2] sm:$0xff]
    %v42 = vld [vmem:[#allocation5] sm:$0xff]
    %v43 = vld [vmem:[#allocation5 + $0x8] sm:$0xff]
    %v44 = vld [vmem:[#allocation5 + $0x10] sm:$0xff]
    %v45 = vld [vmem:[#allocation5 + $0x18] sm:$0xff]
    %v46 = vld [vmem:[%s2] sm:$0x1]
    %v48 = vlaneseq
    %v49 = vshrl.u32 %v48, 7
    %v50 = vsub.s32 0, %v49
    %v51 = vrot.slane %v46, %v50
    %vm53 = vcmask 261120
    %v55 = vsel %vm53, %v41, 0
    %57 = vmatprep.subr.mxu0 0.0
    %58 = vmatpush1.msra.mxu0 0.0
    %59 = vmatprep.subr.mxu0 0.0
    %60 = vmatpush1.msra.mxu0 0.0
    %61 = vmatprep.subr.mxu0 0.0
    %62 = vmatpush1.msra.mxu0 0.0
    %63 = vmatprep.subr.mxu0 0.0
    %64 = vmatpush1.msra.mxu0 0.0
    %65 = vmatprep.subr.mxu0 0.0
    %66 = vmatpush1.msra.mxu0 0.0
    %67 = vmatprep.subr.mxu0 0.0
    %68 = vmatpush1.msra.mxu0 0.0
    %69 = vmatprep.subr.mxu0 0.0
    %70 = vmatpush1.msra.mxu0 0.0
    %71 = vmatprep.subr.mxu0 0.0
    %72 = vmatpush1.msra.mxu0 0.0
    %73 = vmatprep.subr.mxu0 0.0
    %74 = vmatpush1.msra.mxu0 0.0
    %75 = vmatprep.subr.mxu0 0.0
    %76 = vmatpush1.msra.mxu0 0.0
    %77 = vmatprep.subr.mxu0 0.0
    %78 = vmatpush1.msra.mxu0 0.0
    %79 = vmatprep.subr.mxu0 0.0
    %80 = vmatpush1.msra.mxu0 0.0
    %81 = vmatprep.subr.mxu0 0.0
    %82 = vmatpush1.msra.mxu0 %v45
    %83 = vmatprep.subr.mxu0 0.0
    %84 = vmatpush1.msra.mxu0 %v44
    %85 = vmatprep.subr.mxu0 0.0
    %86 = vmatpush1.msra.mxu0 %v43
    %87 = vmatprep.subr.mxu0 0.0
    %88 = vmatpush1.msra.mxu0 %v42
    %89 = vmatprep.subr.mxu0 0.0
    %90 = vmatpush2.msra.mxu0 0.0
    %91 = vmatprep.subr.mxu0 0.0
    %92 = vmatpush2.msra.mxu0 0.0
    %93 = vmatprep.subr.mxu0 0.0
    %94 = vmatpush2.msra.mxu0 0.0
    %95 = vmatprep.subr.mxu0 0.0
    %96 = vmatpush2.msra.mxu0 0.0
    %97 = vmatprep.subr.mxu0 0.0
    %98 = vmatpush2.msra.mxu0 0.0
    %99 = vmatprep.subr.mxu0 0.0
    %100 = vmatpush2.msra.mxu0 0.0
    %101 = vmatprep.subr.mxu0 0.0
    %102 = vmatpush2.msra.mxu0 0.0
    %103 = vmatprep.subr.mxu0 0.0
    %104 = vmatpush2.msra.mxu0 0.0
    %105 = vmatprep.subr.mxu0 0.0
    %106 = vmatpush2.msra.mxu0 0.0
    %107 = vmatprep.subr.mxu0 0.0
    %108 = vmatpush2.msra.mxu0 0.0
    %109 = vmatprep.subr.mxu0 0.0
    %110 = vmatpush2.msra.mxu0 0.0
    %111 = vmatprep.subr.mxu0 0.0
    %112 = vmatpush2.msra.mxu0 0.0
    %113 = vmatprep.subr.mxu0 0.0
    %114 = vmatpush2.msra.mxu0 0.0
    %115 = vmatprep.subr.mxu0 0.0
    %116 = vmatpush2.msra.mxu0 0.0
    %117 = vmatprep.subr.mxu0 0.0
    %118 = vmatpush2.msra.mxu0 0.0
    %119 = vmatprep.subr.mxu0 0.0
    %120 = vmatpush2.msra.mxu0 0.0
    %121 = vmatprep.mubr.f32.mxu0 0.0
    %122 = vmatmul.mubr.f32.gmra.mxu0 %v55
    %v123 = vpop.f32.mrf.mxu0
    %v124 = vadd.f32 %v51, %v123
    %v125 = vpop.f32.mrf.mxu0
    %126 = vdwg.mxu0
    %127 = vmax.xlane.f32.xlu0 %v124
    %v128 = vpop.xlane.xlu0 %127
    %v129 = vsub.f32 %v124, %v128
    %v130 = vmul.f32 %v129, 1.442695
    %v131 = vpow.pop %v130
    %132 = vadd.xlane.f32.xlu0 %v131
    %v133 = vpop.xlane.xlu0 %132
    %v134 = vrcp.pop %v133
    %v135 = vmul.f32 %v131, %v134
    %136 = vst [vmem:[#allocation7] sm:$0xff] %v135
    // Predicated region
    $region22: #{tpu_custom_call.1} parent=1 // pred_check
      _
    $region23: #{tpu_custom_call.1} parent=1 // pred_check_branch
      %138 = sbr.rel (0) target = $region25
    $region24: #{tpu_custom_call.1} parent=1 // pred_region
      %s140 = ssub.s32 128, 128
      %141 = vsyncadd [#allocation4], %s140
      %s143 = sshll.u32 [#allocation7], 4
      %s144 = int_to_ptr.vmem [resolvable:$true] %s143
      %146 = dma.vmem_to_hbm [thread:$0]  %s144, 128, %s3, [#allocation4]
    $region25: #{tpu_custom_call.1} parent=1 // pred_fallthru
      _
    // Predicated region
    $region26: #{tpu_custom_call.1} parent=1 // pred_check
      _
    $region27: #{tpu_custom_call.1} parent=1 // pred_check_branch
      %148 = sbr.rel (0) target = $region29
    $region28: #{tpu_custom_call.1} parent=1 // pred_region
      %149 = dma.done [#allocation4], 128
    $region29: #{tpu_custom_call.1} parent=1 // pred_fallthru
      _
    %150 = vsyncpa [#allocation3], 1
    %151 = vsyncpa [#allocation6], 1
    %152 = vsyncpa [#allocation4], 1

</llo_original>
